<compile_context>
chip_gen: v6e
topology: v6e:2x2x1
jax: 0.10.0
libtpu: 0.0.40
codegen_flags: <defaults>
</compile_context>

<pallas_src>
import functools

import jax
import jax.numpy as jnp
from jax.experimental import pallas as pl
from jax.experimental.pallas import tpu as pltpu

HIDDEN = 128


def _mlp_kernel(x_ref,
                w1_ref, b1_ref,
                w2_ref, b2_ref,
                w3_ref, b3_ref,
                w4_ref, b4_ref,
                o_ref):
    """Fused 4-layer MLP on one batch tile; batch on the lane (last) axis."""
    x = x_ref[...]                                          # (1, tm) f32

    # Layer 1: Linear(1, 128) is a rank-1 outer product -> VPU broadcast mul,
    # keeps the MXU free for the real 128x128 matmuls.
    h = jnp.tanh(w1_ref[...] * x + b1_ref[...])             # (128, tm) f32

    # Layers 2-3: Linear(128, 128) on the MXU, bf16 inputs, f32 accumulation.
    h = jnp.dot(w2_ref[...], h.astype(jnp.bfloat16),
                preferred_element_type=jnp.float32)         # (128, tm) f32
    h = jnp.tanh(h + b2_ref[...])
    h = jnp.dot(w3_ref[...], h.astype(jnp.bfloat16),
                preferred_element_type=jnp.float32)
    h = jnp.tanh(h + b3_ref[...])

    # Layer 4: Linear(128, 1) as (1,128)@(128,tm) -> lane-dense (1, tm) output.
    out = jnp.dot(w4_ref[...], h.astype(jnp.bfloat16),
                  preferred_element_type=jnp.float32)       # (1, tm) f32
    o_ref[...] = (out + b4_ref[0]).astype(o_ref.dtype)


@functools.partial(jax.jit, static_argnames=("tm",))
def value_function_forward(x, params, *, tm=512):
    """x: f32[N, 1] -> f32[N, 1].

    params are in torch.nn.Linear layout: W (out_features, in_features),
    b (out_features,). The batch is padded internally to a multiple of tm.
    """
    assert tm % 128 == 0, "tm must be a multiple of the 128-lane width"
    (w1, b1), (w2, b2), (w3, b3), (w4, b4) = params
    N = x.shape[0]
    n_blocks = pl.cdiv(N, tm)
    Np = n_blocks * tm

    # Batch on lanes: (N, 1) -> (1, Np), zero-padded (padding sliced off below).
    x_t = jnp.pad(x[:, 0], (0, Np - N)).reshape(1, Np)

    # Weight / bias preparation (transposed-layout columns, bf16 matmul weights).
    w1c = w1.reshape(HIDDEN, 1).astype(jnp.float32)         # (128, 1)
    b1c = b1.reshape(HIDDEN, 1).astype(jnp.float32)
    w2c = w2.astype(jnp.bfloat16)                           # (128, 128) torch (out, in)
    b2c = b2.reshape(HIDDEN, 1).astype(jnp.float32)
    w3c = w3.astype(jnp.bfloat16)
    b3c = b3.reshape(HIDDEN, 1).astype(jnp.float32)
    w4c = w4.reshape(1, HIDDEN).astype(jnp.bfloat16)
    b4c = b4.reshape(1).astype(jnp.float32)                 # SMEM scalar

    full = lambda shape: pl.BlockSpec(shape, lambda i: (0, 0))

    out_t = pl.pallas_call(
        _mlp_kernel,
        out_shape=jax.ShapeDtypeStruct((1, Np), jnp.float32),
        grid_spec=pltpu.PrefetchScalarGridSpec(
            num_scalar_prefetch=0,
            grid=(n_blocks,),
            in_specs=[
                pl.BlockSpec((1, tm), lambda i: (0, i)),            # x tile (lane-dense)
                full((HIDDEN, 1)), full((HIDDEN, 1)),               # W1, b1
                full((HIDDEN, HIDDEN)), full((HIDDEN, 1)),          # W2, b2
                full((HIDDEN, HIDDEN)), full((HIDDEN, 1)),          # W3, b3
                full((1, HIDDEN)),                                  # W4
                pl.BlockSpec(memory_space=pltpu.MemorySpace.SMEM),  # b4 scalar
            ],
            out_specs=pl.BlockSpec((1, tm), lambda i: (0, i)),
        ),
        compiler_params=pltpu.CompilerParams(
            dimension_semantics=("parallel",)),
    )(x_t, w1c, b1c, w2c, b2c, w3c, b3c, w4c, b4c)

    return out_t[0, :N].reshape(N, 1)


def init_params(key, hidden=HIDDEN):
    """torch.nn.Linear-style init: W (out, in), b (out,), uniform +/-1/sqrt(fan_in)."""
    dims = [(1, hidden), (hidden, hidden), (hidden, hidden), (hidden, 1)]
    params = []
    for fan_in, fan_out in dims:
        key, kw, kb = jax.random.split(key, 3)
        bound = 1.0 / jnp.sqrt(fan_in)
        w = jax.random.uniform(kw, (fan_out, fan_in), jnp.float32, -bound, bound)
        b = jax.random.uniform(kb, (fan_out,), jnp.float32, -bound, bound)
        params.append((w, b))
    return tuple(params)


def reference_forward(x, params):
    """Pure-f32 reference matching torch semantics: y = x @ W.T + b."""
    (w1, b1), (w2, b2), (w3, b3), (w4, b4) = params
    h = jnp.tanh(x @ w1.T + b1)
    h = jnp.tanh(h @ w2.T + b2)
    h = jnp.tanh(h @ w3.T + b3)
    return h @ w4.T + b4


if __name__ == "__main__":
    key = jax.random.PRNGKey(0)
    key, kx = jax.random.split(key)

    N = 512                       # batch of scalar samples
    x = jax.random.normal(kx, (N, 1), jnp.float32)
    params = init_params(key, hidden=HIDDEN)

    # tm=256 -> grid of 2 steps so both v7x TensorCores get work.
    out = value_function_forward(x, params, tm=256)
    out = jax.block_until_ready(out)

    ref = reference_forward(x, params)
    assert out.shape == (N, 1)
    # Layers 2-4 use bf16 MXU inputs (f32 accumulation) -> relaxed tolerance
    # against the pure-f32 reference.
    max_err = float(jnp.max(jnp.abs(out - ref)))
    assert max_err < 5e-2, f"mismatch vs reference: max abs err {max_err}"

    # The numpy branch of forward() additionally reduces to a scalar mean;
    # that reduction is trivial glue and done here in plain JAX.
    _ = jnp.mean(out)

    print("KERNEL_OK")
</pallas_src>

<mosaic_0001>
module attributes {stable_mosaic.version = 11 : i64} {
  func.func @_mlp_kernel(%arg0: i32, %arg1: memref<1x256xf32, #tpu.memory_space<vmem>>, %arg2: memref<128x1xf32, #tpu.memory_space<vmem>>, %arg3: memref<128x1xf32, #tpu.memory_space<vmem>>, %arg4: memref<128x128xbf16, #tpu.memory_space<vmem>>, %arg5: memref<128x1xf32, #tpu.memory_space<vmem>>, %arg6: memref<128x128xbf16, #tpu.memory_space<vmem>>, %arg7: memref<128x1xf32, #tpu.memory_space<vmem>>, %arg8: memref<1x128xbf16, #tpu.memory_space<vmem>>, %arg9: memref<1xf32, #tpu.memory_space<smem>>, %arg10: memref<1x256xf32, #tpu.memory_space<vmem>>) attributes {dimension_semantics = [#tpu.dimension_semantics<parallel>], iteration_bounds = array<i64: 2>, scalar_prefetch = 0 : i64, scratch_operands = 0 : i64, tpu.core_type = #tpu.core_type<tc>, window_params = [{transform_indices = @transform_0, window_bounds = array<i64: 1, 256>}, {pipeline_mode = #tpu.pipeline_mode<synchronous>, transform_indices = @transform_1, window_bounds = array<i64: 128, 1>}, {pipeline_mode = #tpu.pipeline_mode<synchronous>, transform_indices = @transform_2, window_bounds = array<i64: 128, 1>}, {pipeline_mode = #tpu.pipeline_mode<synchronous>, transform_indices = @transform_3, window_bounds = array<i64: 128, 128>}, {pipeline_mode = #tpu.pipeline_mode<synchronous>, transform_indices = @transform_4, window_bounds = array<i64: 128, 1>}, {pipeline_mode = #tpu.pipeline_mode<synchronous>, transform_indices = @transform_5, window_bounds = array<i64: 128, 128>}, {pipeline_mode = #tpu.pipeline_mode<synchronous>, transform_indices = @transform_6, window_bounds = array<i64: 128, 1>}, {pipeline_mode = #tpu.pipeline_mode<synchronous>, transform_indices = @transform_7, window_bounds = array<i64: 1, 128>}, {transform_indices = @transform_8, window_bounds = array<i64: 1>}, {transform_indices = @transform_9, window_bounds = array<i64: 1, 256>}]} {
    %c0 = arith.constant 0 : index
    %c0_0 = arith.constant 0 : index
    %0 = vector.load %arg1[%c0, %c0_0] : memref<1x256xf32, #tpu.memory_space<vmem>>, vector<1x256xf32>
    %c0_1 = arith.constant 0 : index
    %c0_2 = arith.constant 0 : index
    %1 = vector.load %arg2[%c0_1, %c0_2] : memref<128x1xf32, #tpu.memory_space<vmem>>, vector<128x1xf32>
    %2 = vector.broadcast %1 : vector<128x1xf32> to vector<128x256xf32>
    %3 = vector.broadcast %0 : vector<1x256xf32> to vector<128x256xf32>
    %4 = arith.mulf %2, %3 : vector<128x256xf32>
    %c0_3 = arith.constant 0 : index
    %c0_4 = arith.constant 0 : index
    %5 = vector.load %arg3[%c0_3, %c0_4] : memref<128x1xf32, #tpu.memory_space<vmem>>, vector<128x1xf32>
    %6 = vector.broadcast %5 : vector<128x1xf32> to vector<128x256xf32>
    %7 = arith.addf %4, %6 : vector<128x256xf32>
    %8 = math.tanh %7 : vector<128x256xf32>
    %c0_5 = arith.constant 0 : index
    %c0_6 = arith.constant 0 : index
    %9 = vector.load %arg4[%c0_5, %c0_6] : memref<128x128xbf16, #tpu.memory_space<vmem>>, vector<128x128xbf16>
    %10 = arith.truncf %8 : vector<128x256xf32> to vector<128x256xbf16>
    %cst = arith.constant dense<0.000000e+00> : vector<128x256xf32>
    %11 = tpu.matmul %9, %10, %cst {dimension_numbers = #tpu.dot_dimension_numbers<[1], [0], [0], [1], [0, 0, 1, 1], [], []>} : vector<128x128xbf16>, vector<128x256xbf16>, vector<128x256xf32> -> vector<128x256xf32>
    %c0_7 = arith.constant 0 : index
    %c0_8 = arith.constant 0 : index
    %12 = vector.load %arg5[%c0_7, %c0_8] : memref<128x1xf32, #tpu.memory_space<vmem>>, vector<128x1xf32>
    %13 = vector.broadcast %12 : vector<128x1xf32> to vector<128x256xf32>
    %14 = arith.addf %11, %13 : vector<128x256xf32>
    %15 = math.tanh %14 : vector<128x256xf32>
    %c0_9 = arith.constant 0 : index
    %c0_10 = arith.constant 0 : index
    %16 = vector.load %arg6[%c0_9, %c0_10] : memref<128x128xbf16, #tpu.memory_space<vmem>>, vector<128x128xbf16>
    %17 = arith.truncf %15 : vector<128x256xf32> to vector<128x256xbf16>
    %cst_11 = arith.constant dense<0.000000e+00> : vector<128x256xf32>
    %18 = tpu.matmul %16, %17, %cst_11 {dimension_numbers = #tpu.dot_dimension_numbers<[1], [0], [0], [1], [0, 0, 1, 1], [], []>} : vector<128x128xbf16>, vector<128x256xbf16>, vector<128x256xf32> -> vector<128x256xf32>
    %c0_12 = arith.constant 0 : index
    %c0_13 = arith.constant 0 : index
    %19 = vector.load %arg7[%c0_12, %c0_13] : memref<128x1xf32, #tpu.memory_space<vmem>>, vector<128x1xf32>
    %20 = vector.broadcast %19 : vector<128x1xf32> to vector<128x256xf32>
    %21 = arith.addf %18, %20 : vector<128x256xf32>
    %22 = math.tanh %21 : vector<128x256xf32>
    %c0_14 = arith.constant 0 : index
    %c0_15 = arith.constant 0 : index
    %23 = vector.load %arg8[%c0_14, %c0_15] : memref<1x128xbf16, #tpu.memory_space<vmem>>, vector<1x128xbf16>
    %24 = arith.truncf %22 : vector<128x256xf32> to vector<128x256xbf16>
    %cst_16 = arith.constant dense<0.000000e+00> : vector<1x256xf32>
    %25 = tpu.matmul %23, %24, %cst_16 {dimension_numbers = #tpu.dot_dimension_numbers<[1], [0], [0], [1], [0, 0, 1, 1], [], []>} : vector<1x128xbf16>, vector<128x256xbf16>, vector<1x256xf32> -> vector<1x256xf32>
    %c0_17 = arith.constant 0 : index
    %26 = memref.load %arg9[%c0_17] : memref<1xf32, #tpu.memory_space<smem>>
    %27 = vector.broadcast %26 : f32 to vector<1x256xf32>
    %28 = arith.addf %25, %27 : vector<1x256xf32>
    %c0_18 = arith.constant 0 : index
    %c0_19 = arith.constant 0 : index
    %29 = vector.load %arg10[%c0_18, %c0_19] : memref<1x256xf32, #tpu.memory_space<vmem>>, vector<1x256xf32>
    tpu.vector_store %arg10[%c0_18, %c0_19], %28 {strides = array<i32>} : memref<1x256xf32, #tpu.memory_space<vmem>>, vector<1x256xf32>,
    return
  }
  func.func @transform_0(%arg0: i32) -> (i32, i32) {
    %c0_i32 = arith.constant 0 : i32
    %c0_i32_0 = arith.constant 0 : i32
    return %c0_i32, %arg0 : i32, i32
  }
  func.func @transform_1(%arg0: i32) -> (i32, i32) {
    %c0_i32 = arith.constant 0 : i32
    %c0_i32_0 = arith.constant 0 : i32
    %c0_i32_1 = arith.constant 0 : i32
    return %c0_i32, %c0_i32_0 : i32, i32
  }
  func.func @transform_2(%arg0: i32) -> (i32, i32) {
    %c0_i32 = arith.constant 0 : i32
    %c0_i32_0 = arith.constant 0 : i32
    %c0_i32_1 = arith.constant 0 : i32
    return %c0_i32, %c0_i32_0 : i32, i32
  }
  func.func @transform_3(%arg0: i32) -> (i32, i32) {
    %c0_i32 = arith.constant 0 : i32
    %c0_i32_0 = arith.constant 0 : i32
    %c0_i32_1 = arith.constant 0 : i32
    return %c0_i32, %c0_i32_0 : i32, i32
  }
  func.func @transform_4(%arg0: i32) -> (i32, i32) {
    %c0_i32 = arith.constant 0 : i32
    %c0_i32_0 = arith.constant 0 : i32
    %c0_i32_1 = arith.constant 0 : i32
    return %c0_i32, %c0_i32_0 : i32, i32
  }
  func.func @transform_5(%arg0: i32) -> (i32, i32) {
    %c0_i32 = arith.constant 0 : i32
    %c0_i32_0 = arith.constant 0 : i32
    %c0_i32_1 = arith.constant 0 : i32
    return %c0_i32, %c0_i32_0 : i32, i32
  }
  func.func @transform_6(%arg0: i32) -> (i32, i32) {
    %c0_i32 = arith.constant 0 : i32
    %c0_i32_0 = arith.constant 0 : i32
    %c0_i32_1 = arith.constant 0 : i32
    return %c0_i32, %c0_i32_0 : i32, i32
  }
  func.func @transform_7(%arg0: i32) -> (i32, i32) {
    %c0_i32 = arith.constant 0 : i32
    %c0_i32_0 = arith.constant 0 : i32
    %c0_i32_1 = arith.constant 0 : i32
    return %c0_i32, %c0_i32_0 : i32, i32
  }
  func.func @transform_8(%arg0: i32) -> i32 {
    %c0_i32 = arith.constant 0 : i32
    %c0_i32_0 = arith.constant 0 : i32
    return %c0_i32 : i32
  }
  func.func @transform_9(%arg0: i32) -> (i32, i32) {
    %c0_i32 = arith.constant 0 : i32
    %c0_i32_0 = arith.constant 0 : i32
    return %c0_i32, %arg0 : i32, i32
  }
}

</mosaic_0001>

<llo_original>
// kernel: value_function_forward.1
$region0: #{value_function_forward.1}
  #allocation0 [shape = 'u32[]', space=smem, size = 0x4, offset = 0x4, fixed_abs, tag = 'smem constant byte address 0x4 - core index']
  #allocation1 [shape = 'u32[144,128]{1,0:T(1,128)}', space=vmem, size = 0x12000, scoped, tag = 'internal scratch']
  #allocation2 [shape = 'f32[1]{0:T(128)S(6)}', space=smem, size = 0x200, scoped, tag = 'scoped memory for value_function_forward.1']
  %s0 = inlined_call_operand.vmem [shape: f32[1,512], index: 0, kind: input, shape index: {}]
  %s1 = inlined_call_operand.vmem [shape: f32[128,1], index: 1, kind: input, shape index: {}]
  %s2 = inlined_call_operand.vmem [shape: f32[128,1], index: 2, kind: input, shape index: {}]
  %s3 = inlined_call_operand.vmem [shape: bf16[128,128], index: 3, kind: input, shape index: {}]
  %s4 = inlined_call_operand.vmem [shape: f32[128,1], index: 4, kind: input, shape index: {}]
  %s5 = inlined_call_operand.vmem [shape: bf16[128,128], index: 5, kind: input, shape index: {}]
  %s6 = inlined_call_operand.vmem [shape: f32[128,1], index: 6, kind: input, shape index: {}]
  %s7 = inlined_call_operand.vmem [shape: bf16[1,128], index: 7, kind: input, shape index: {}]
  %s8 = inlined_call_operand.<no memory space> [shape: f32[1], index: 8, kind: input, shape index: {}]
  %s9 = inlined_call_operand.hbm [shape: f32[1,512], index: 9, kind: output, shape index: {}]
  %s10 = sld [smem:[#allocation0]]
  $region69: #{value_function_forward.1} parent=0
    _
  %s12 = ssub.s32 1, %s10
  %s13 = scalar_select 0, %s12, %s10
  %14 = sst [smem:[#allocation2]] %s8
  $region1: #{value_function_forward.1} parent=0
    #allocation3 [shape = 'u8[2048]{0}', space=vmem, size = 0x800, scoped, tag = 'output window, operand 0']
    #allocation4 [shape = 's32[2]{0}', space=sflag, size = 0x8, scoped, tag = 'scoped memory for value_function_forward.1']
    %15 = vsyncpa [#allocation4], 0
    %s16 = scalar_lea.sflag [#allocation4], 1
    %17 = vsyncpa %s16, 0
    loop: start=0, step=1, limit=4
    $region2: #{value_function_forward.1} parent=1 // loop_pre_header
      _
    $region3: #{value_function_forward.1} parent=1 // loop_header
      %s19 = sphi 0, %s23
      %p20 = scmp.ge.s32.totalorder %s19, 4
      %s29 = sphi 0, %s31
      %s32 = sphi 0, %s29
      %s33 = sphi 0, %s32
      %s49 = sphi 0, %s33
      %s53 = sphi 0, %s53
      %s55 = sphi 0, %s53
      %s56 = sphi 0, %s55
      %s70 = sphi 0, %s56
      %s74 = sphi 0, %s74
      %s76 = sphi 0, %s74
      %s77 = sphi 0, %s76
      %s91 = sphi 0, %s77
      %s95 = sphi 0, %s95
      %s97 = sphi 0, %s95
      %s98 = sphi 0, %s97
      %s112 = sphi 0, %s98
      %s116 = sphi 0, %s116
      %s118 = sphi 0, %s116
      %s119 = sphi 0, %s118
      %s133 = sphi 0, %s119
      %s137 = sphi 0, %s137
      %s139 = sphi 0, %s137
      %s140 = sphi 0, %s139
      %s154 = sphi 0, %s140
      %s158 = sphi 0, %s158
      %s160 = sphi 0, %s158
      %s161 = sphi 0, %s160
      %s175 = sphi 0, %s161
      %s179 = sphi 0, %s179
      %s181 = sphi 0, %s179
      %s182 = sphi 0, %s181
      %s196 = sphi 0, %s182
      %s200 = sphi 0, %s200
      %s202 = sphi 0, %s200
      %s203 = sphi 0, %s202
      %s217 = sphi 0, %s203
      %s223 = sphi 0, %s225
      %s226 = sphi 0, %s223
      %s227 = sphi 0, %s226
      %s243 = sphi 0, %s227
    $region4: #{value_function_forward.1} parent=1 // loop_header_branch
      %22 = sbr.rel (%p20) target = $region8
    $region5: #{value_function_forward.1} parent=1 // loop_body
      %s24 = ssub.s32 %s19, 1
      %s25 = ssub.s32 %s19, 2
      %s26 = sadd.s32 %s19, 1
      %s27 = ssub.s32 %s19, %s26
      %p28 = scmp.eq.s32.totalorder %s27, 0
      %s30 = sadd.s32 %s29, 1
      %s31 = scalar_select %p28, %s29, %s30
      %p34 = pneg %p28
      %p35 = scmp.eq.s32.totalorder %s19, 1
      %p36 = por %p34, %p35
      %p37 = scmp.ne.s32.totalorder %s29, %s32
      %p38 = scmp.eq.s32.totalorder %s19, 0
      %p39 = por %p37, %p38
      %p40 = scmp.ne.s32.totalorder %s29, %s32
      %p41 = scmp.eq.s32.totalorder %s24, 1
      %p42 = por %p40, %p41
      %p43 = scmp.ne.s32.totalorder %s32, %s33
      %p44 = scmp.eq.s32.totalorder %s24, 0
      %p45 = por %p43, %p44
      %p46 = scmp.ne.s32.totalorder %s32, %s33
      %p47 = scmp.eq.s32.totalorder %s25, 1
      %p48 = por %p46, %p47
      %p50 = scmp.ne.s32.totalorder %s33, %s49
      %p51 = scmp.eq.s32.totalorder %s25, 0
      %p52 = por %p50, %p51
      %s54 = sadd.s32 %s53, 1
      %p57 = scmp.eq.s32.totalorder %s19, 1
      %p58 = scmp.ne.s32.totalorder %s53, %s55
      %p59 = scmp.eq.s32.totalorder %s19, 0
      %p60 = por %p58, %p59
      %p61 = scmp.ne.s32.totalorder %s53, %s55
      %p62 = scmp.eq.s32.totalorder %s24, 1
      %p63 = por %p61, %p62
      %p64 = scmp.ne.s32.totalorder %s55, %s56
      %p65 = scmp.eq.s32.totalorder %s24, 0
      %p66 = por %p64, %p65
      %p67 = scmp.ne.s32.totalorder %s55, %s56
      %p68 = scmp.eq.s32.totalorder %s25, 1
      %p69 = por %p67, %p68
      %p71 = scmp.ne.s32.totalorder %s56, %s70
      %p72 = scmp.eq.s32.totalorder %s25, 0
      %p73 = por %p71, %p72
      %s75 = sadd.s32 %s74, 1
      %p78 = scmp.eq.s32.totalorder %s19, 1
      %p79 = scmp.ne.s32.totalorder %s74, %s76
      %p80 = scmp.eq.s32.totalorder %s19, 0
      %p81 = por %p79, %p80
      %p82 = scmp.ne.s32.totalorder %s74, %s76
      %p83 = scmp.eq.s32.totalorder %s24, 1
      %p84 = por %p82, %p83
      %p85 = scmp.ne.s32.totalorder %s76, %s77
      %p86 = scmp.eq.s32.totalorder %s24, 0
      %p87 = por %p85, %p86
      %p88 = scmp.ne.s32.totalorder %s76, %s77
      %p89 = scmp.eq.s32.totalorder %s25, 1
      %p90 = por %p88, %p89
      %p92 = scmp.ne.s32.totalorder %s77, %s91
      %p93 = scmp.eq.s32.totalorder %s25, 0
      %p94 = por %p92, %p93
      %s96 = sadd.s32 %s95, 1
      %p99 = scmp.eq.s32.totalorder %s19, 1
      %p100 = scmp.ne.s32.totalorder %s95, %s97
      %p101 = scmp.eq.s32.totalorder %s19, 0
      %p102 = por %p100, %p101
      %p103 = scmp.ne.s32.totalorder %s95, %s97
      %p104 = scmp.eq.s32.totalorder %s24, 1
      %p105 = por %p103, %p104
      %p106 = scmp.ne.s32.totalorder %s97, %s98
      %p107 = scmp.eq.s32.totalorder %s24, 0
      %p108 = por %p106, %p107
      %p109 = scmp.ne.s32.totalorder %s97, %s98
      %p110 = scmp.eq.s32.totalorder %s25, 1
      %p111 = por %p109, %p110
      %p113 = scmp.ne.s32.totalorder %s98, %s112
      %p114 = scmp.eq.s32.totalorder %s25, 0
      %p115 = por %p113, %p114
      %s117 = sadd.s32 %s116, 1
      %p120 = scmp.eq.s32.totalorder %s19, 1
      %p121 = scmp.ne.s32.totalorder %s116, %s118
      %p122 = scmp.eq.s32.totalorder %s19, 0
      %p123 = por %p121, %p122
      %p124 = scmp.ne.s32.totalorder %s116, %s118
      %p125 = scmp.eq.s32.totalorder %s24, 1
      %p126 = por %p124, %p125
      %p127 = scmp.ne.s32.totalorder %s118, %s119
      %p128 = scmp.eq.s32.totalorder %s24, 0
      %p129 = por %p127, %p128
      %p130 = scmp.ne.s32.totalorder %s118, %s119
      %p131 = scmp.eq.s32.totalorder %s25, 1
      %p132 = por %p130, %p131
      %p134 = scmp.ne.s32.totalorder %s119, %s133
      %p135 = scmp.eq.s32.totalorder %s25, 0
      %p136 = por %p134, %p135
      %s138 = sadd.s32 %s137, 1
      %p141 = scmp.eq.s32.totalorder %s19, 1
      %p142 = scmp.ne.s32.totalorder %s137, %s139
      %p143 = scmp.eq.s32.totalorder %s19, 0
      %p144 = por %p142, %p143
      %p145 = scmp.ne.s32.totalorder %s137, %s139
      %p146 = scmp.eq.s32.totalorder %s24, 1
      %p147 = por %p145, %p146
      %p148 = scmp.ne.s32.totalorder %s139, %s140
      %p149 = scmp.eq.s32.totalorder %s24, 0
      %p150 = por %p148, %p149
      %p151 = scmp.ne.s32.totalorder %s139, %s140
      %p152 = scmp.eq.s32.totalorder %s25, 1
      %p153 = por %p151, %p152
      %p155 = scmp.ne.s32.totalorder %s140, %s154
      %p156 = scmp.eq.s32.totalorder %s25, 0
      %p157 = por %p155, %p156
      %s159 = sadd.s32 %s158, 1
      %p162 = scmp.eq.s32.totalorder %s19, 1
      %p163 = scmp.ne.s32.totalorder %s158, %s160
      %p164 = scmp.eq.s32.totalorder %s19, 0
      %p165 = por %p163, %p164
      %p166 = scmp.ne.s32.totalorder %s158, %s160
      %p167 = scmp.eq.s32.totalorder %s24, 1
      %p168 = por %p166, %p167
      %p169 = scmp.ne.s32.totalorder %s160, %s161
      %p170 = scmp.eq.s32.totalorder %s24, 0
      %p171 = por %p169, %p170
      %p172 = scmp.ne.s32.totalorder %s160, %s161
      %p173 = scmp.eq.s32.totalorder %s25, 1
      %p174 = por %p172, %p173
      %p176 = scmp.ne.s32.totalorder %s161, %s175
      %p177 = scmp.eq.s32.totalorder %s25, 0
      %p178 = por %p176, %p177
      %s180 = sadd.s32 %s179, 1
      %p183 = scmp.eq.s32.totalorder %s19, 1
      %p184 = scmp.ne.s32.totalorder %s179, %s181
      %p185 = scmp.eq.s32.totalorder %s19, 0
      %p186 = por %p184, %p185
      %p187 = scmp.ne.s32.totalorder %s179, %s181
      %p188 = scmp.eq.s32.totalorder %s24, 1
      %p189 = por %p187, %p188
      %p190 = scmp.ne.s32.totalorder %s181, %s182
      %p191 = scmp.eq.s32.totalorder %s24, 0
      %p192 = por %p190, %p191
      %p193 = scmp.ne.s32.totalorder %s181, %s182
      %p194 = scmp.eq.s32.totalorder %s25, 1
      %p195 = por %p193, %p194
      %p197 = scmp.ne.s32.totalorder %s182, %s196
      %p198 = scmp.eq.s32.totalorder %s25, 0
      %p199 = por %p197, %p198
      %s201 = sadd.s32 %s200, 1
      %p204 = scmp.eq.s32.totalorder %s19, 1
      %p205 = scmp.ne.s32.totalorder %s200, %s202
      %p206 = scmp.eq.s32.totalorder %s19, 0
      %p207 = por %p205, %p206
      %p208 = scmp.ne.s32.totalorder %s200, %s202
      %p209 = scmp.eq.s32.totalorder %s24, 1
      %p210 = por %p208, %p209
      %p211 = scmp.ne.s32.totalorder %s202, %s203
      %p212 = scmp.eq.s32.totalorder %s24, 0
      %p213 = por %p211, %p212
      %p214 = scmp.ne.s32.totalorder %s202, %s203
      %p215 = scmp.eq.s32.totalorder %s25, 1
      %p216 = por %p214, %p215
      %p218 = scmp.ne.s32.totalorder %s203, %s217
      %p219 = scmp.eq.s32.totalorder %s25, 0
      %p220 = por %p218, %p219
      %s221 = ssub.s32 %s19, %s26
      %p222 = scmp.eq.s32.totalorder %s221, 0
      %s224 = sadd.s32 %s223, 1
      %s225 = scalar_select %p222, %s223, %s224
      %p228 = pneg %p222
      %p229 = scmp.eq.s32.totalorder %s19, 1
      %p230 = por %p228, %p229
      %p231 = scmp.ne.s32.totalorder %s223, %s226
      %p232 = scmp.eq.s32.totalorder %s19, 0
      %p233 = por %p231, %p232
      %p234 = scmp.ne.s32.totalorder %s223, %s226
      %p235 = scmp.eq.s32.totalorder %s24, 1
      %p236 = por %p234, %p235
      %p237 = scmp.ne.s32.totalorder %s226, %s227
      %p238 = scmp.eq.s32.totalorder %s24, 0
      %p239 = por %p237, %p238
      %p240 = scmp.ne.s32.totalorder %s226, %s227
      %p241 = scmp.eq.s32.totalorder %s25, 1
      %p242 = por %p240, %p241
      %p244 = scmp.ne.s32.totalorder %s227, %s243
      %p245 = scmp.eq.s32.totalorder %s25, 0
      %p246 = por %p244, %p245
      %p247 = scmp.le.s32.totalorder 1, %s19
      %p248 = scmp.lt.s32.totalorder %s19, 3
      %p249 = pnand %p247, %p248
      %p250 = pneg %p249
      // Predicated region
      $region9: #{value_function_forward.1} parent=5 // pred_check
        _
      $region10: #{value_function_forward.1} parent=5 // pred_check_branch
        %252 = sbr.rel (%p249) target = $region12
      $region11: #{value_function_forward.1} parent=5 // pred_region
        %s253 = ssub.s32 %s19, 1
        // Predicated region
        $region13: #{value_function_forward.1} parent=11 // pred_check
          %p254 = pneg %p66
        $region14: #{value_function_forward.1} parent=11 // pred_check_branch
          %256 = sbr.rel (%p254) target = $region16
        $region15: #{value_function_forward.1} parent=11 // pred_region
          _
        $region16: #{value_function_forward.1} parent=11 // pred_fallthru
          _
        // Predicated region
        $region17: #{value_function_forward.1} parent=11 // pred_check
          %p257 = pneg %p87
        $region18: #{value_function_forward.1} parent=11 // pred_check_branch
          %259 = sbr.rel (%p257) target = $region20
        $region19: #{value_function_forward.1} parent=11 // pred_region
          _
        $region20: #{value_function_forward.1} parent=11 // pred_fallthru
          _
        // Predicated region
        $region21: #{value_function_forward.1} parent=11 // pred_check
          %p260 = pneg %p108
        $region22: #{value_function_forward.1} parent=11 // pred_check_branch
          %262 = sbr.rel (%p260) target = $region24
        $region23: #{value_function_forward.1} parent=11 // pred_region
          _
        $region24: #{value_function_forward.1} parent=11 // pred_fallthru
          _
        // Predicated region
        $region25: #{value_function_forward.1} parent=11 // pred_check
          %p263 = pneg %p129
        $region26: #{value_function_forward.1} parent=11 // pred_check_branch
          %265 = sbr.rel (%p263) target = $region28
        $region27: #{value_function_forward.1} parent=11 // pred_region
          _
        $region28: #{value_function_forward.1} parent=11 // pred_fallthru
          _
        // Predicated region
        $region29: #{value_function_forward.1} parent=11 // pred_check
          %p266 = pneg %p150
        $region30: #{value_function_forward.1} parent=11 // pred_check_branch
          %268 = sbr.rel (%p266) target = $region32
        $region31: #{value_function_forward.1} parent=11 // pred_region
          _
        $region32: #{value_function_forward.1} parent=11 // pred_fallthru
          _
        // Predicated region
        $region33: #{value_function_forward.1} parent=11 // pred_check
          %p269 = pneg %p171
        $region34: #{value_function_forward.1} parent=11 // pred_check_branch
          %271 = sbr.rel (%p269) target = $region36
        $region35: #{value_function_forward.1} parent=11 // pred_region
          _
        $region36: #{value_function_forward.1} parent=11 // pred_fallthru
          _
        // Predicated region
        $region37: #{value_function_forward.1} parent=11 // pred_check
          %p272 = pneg %p192
        $region38: #{value_function_forward.1} parent=11 // pred_check_branch
          %274 = sbr.rel (%p272) target = $region40
        $region39: #{value_function_forward.1} parent=11 // pred_region
          _
        $region40: #{value_function_forward.1} parent=11 // pred_fallthru
          _
        // Predicated region
        $region41: #{value_function_forward.1} parent=11 // pred_check
          %p275 = pneg %p213
        $region42: #{value_function_forward.1} parent=11 // pred_check_branch
          %277 = sbr.rel (%p275) target = $region44
        $region43: #{value_function_forward.1} parent=11 // pred_region
          _
        $region44: #{value_function_forward.1} parent=11 // pred_fallthru
          _
      $region12: #{value_function_forward.1} parent=5 // pred_fallthru
        _
      %p278 = scmp.lt.s32.totalorder %s19, 2
      // Predicated region
      $region45: #{value_function_forward.1} parent=5 // pred_check
        %p279 = pneg %p278
      $region46: #{value_function_forward.1} parent=5 // pred_check_branch
        %281 = sbr.rel (%p279) target = $region48
      $region47: #{value_function_forward.1} parent=5 // pred_region
        // Predicated region
        $region49: #{value_function_forward.1} parent=47 // pred_check
          %p282 = pneg %p39
        $region50: #{value_function_forward.1} parent=47 // pred_check_branch
          %284 = sbr.rel (%p282) target = $region52
        $region51: #{value_function_forward.1} parent=47 // pred_region
          %s285 = smul.u32 2, %s19
          %p286 = scmp.lt.s32.totalorder %s285, 3
          %s287 = scalar_select %p286, %s285, 3
          %s288 = scalar_lea.vmem %s0, %s287
          %s289 = smul.u32 2, %s19
        $region52: #{value_function_forward.1} parent=47 // pred_fallthru
          _
      $region48: #{value_function_forward.1} parent=5 // pred_fallthru
        _
      %p290 = scmp.le.s32.totalorder 1, %s19
      %p291 = scmp.lt.s32.totalorder %s19, 3
      %p292 = pnand %p290, %p291
      %p293 = pneg %p292
      // Predicated region
      $region53: #{value_function_forward.1} parent=5 // pred_check
        _
      $region54: #{value_function_forward.1} parent=5 // pred_check_branch
        %295 = sbr.rel (%p292) target = $region56
      $region55: #{value_function_forward.1} parent=5 // pred_region
        %s296 = ssub.s32 %s19, 1
        %s297 = smul.u32 2, %s24
        %p298 = scmp.lt.s32.totalorder %s297, 3
        %s299 = scalar_select %p298, %s297, 3
        %s300 = scalar_lea.vmem %s0, %s299
        %p301 = pneg %p45
        %p302 = pneg %p42
        %p303 = pneg %p66
        %p304 = pneg %p63
        %p305 = pneg %p87
        %p306 = pneg %p84
        %p307 = pneg %p108
        %p308 = pneg %p105
        %p309 = pneg %p129
        %p310 = pneg %p126
        %p311 = pneg %p150
        %p312 = pneg %p147
        %p313 = pneg %p171
        %p314 = pneg %p168
        %p315 = pneg %p192
        %p316 = pneg %p189
        %p317 = pneg %p213
        %p318 = pneg %p210
        %p319 = pneg %p239
        %p320 = pneg %p236
        %s321 = sand.u32 %s226, 1
        %s322 = scalar_lea.sflag [#allocation4], %s321
        %s323 = sand.u32 %s226, 1
        %s324 = smul.addr %s323, 2
        %s325 = scalar_lea.vmem [#allocation3], %s324
        %s326 = smul.u32 2, %s24
        %p327 = scmp.lt.s32.totalorder %s326, 3
        %s328 = scalar_select %p327, %s326, 3
        %s329 = scalar_lea.vmem %s0, %s328
        %s330 = smul.u32 2, %s24
        %s331 = smul.u32 2, %s24
        %v333 = vld [vmem:[%s329] sm:$0x3]
        %v334 = vld [vmem:[%s1] sm:$0xff]
        %v335 = vld [vmem:[%s1 + $0x8] sm:$0xff]
        %v336 = vld [vmem:[%s1 + $0x10] sm:$0xff]
        %v337 = vld [vmem:[%s1 + $0x18] sm:$0xff]
        %v338 = vld [vmem:[%s1 + $0x20] sm:$0xff]
        %v339 = vld [vmem:[%s1 + $0x28] sm:$0xff]
        %v340 = vld [vmem:[%s1 + $0x30] sm:$0xff]
        %v341 = vld [vmem:[%s1 + $0x38] sm:$0xff]
        %v342 = vld [vmem:[%s1 + $0x40] sm:$0xff]
        %v343 = vld [vmem:[%s1 + $0x48] sm:$0xff]
        %v344 = vld [vmem:[%s1 + $0x50] sm:$0xff]
        %v345 = vld [vmem:[%s1 + $0x58] sm:$0xff]
        %v346 = vld [vmem:[%s1 + $0x60] sm:$0xff]
        %v347 = vld [vmem:[%s1 + $0x68] sm:$0xff]
        %v348 = vld [vmem:[%s1 + $0x70] sm:$0xff]
        %v349 = vld [vmem:[%s1 + $0x78] sm:$0xff]
        %351 = vset.pattern.permute.xlu0 0
        %352 = vperm.xlu0 %351, %v334
        %v353 = vpop.permute.xlu0 %352
        %356 = vset.pattern.permute.xlu0 0
        %357 = vperm.xlu0 %356, %v335
        %v358 = vpop.permute.xlu0 %357
        %361 = vset.pattern.permute.xlu0 0
        %362 = vperm.xlu0 %361, %v336
        %v363 = vpop.permute.xlu0 %362
        %366 = vset.pattern.permute.xlu0 0
        %367 = vperm.xlu0 %366, %v337
        %v368 = vpop.permute.xlu0 %367
        %371 = vset.pattern.permute.xlu0 0
        %372 = vperm.xlu0 %371, %v338
        %v373 = vpop.permute.xlu0 %372
        %376 = vset.pattern.permute.xlu0 0
        %377 = vperm.xlu0 %376, %v339
        %v378 = vpop.permute.xlu0 %377
        %381 = vset.pattern.permute.xlu0 0
        %382 = vperm.xlu0 %381, %v340
        %v383 = vpop.permute.xlu0 %382
        %386 = vset.pattern.permute.xlu0 0
        %387 = vperm.xlu0 %386, %v341
        %v388 = vpop.permute.xlu0 %387
        %391 = vset.pattern.permute.xlu0 0
        %392 = vperm.xlu0 %391, %v342
        %v393 = vpop.permute.xlu0 %392
        %396 = vset.pattern.permute.xlu0 0
        %397 = vperm.xlu0 %396, %v343
        %v398 = vpop.permute.xlu0 %397
        %401 = vset.pattern.permute.xlu0 0
        %402 = vperm.xlu0 %401, %v344
        %v403 = vpop.permute.xlu0 %402
        %406 = vset.pattern.permute.xlu0 0
        %407 = vperm.xlu0 %406, %v345
        %v408 = vpop.permute.xlu0 %407
        %411 = vset.pattern.permute.xlu0 0
        %412 = vperm.xlu0 %411, %v346
        %v413 = vpop.permute.xlu0 %412
        %416 = vset.pattern.permute.xlu0 0
        %417 = vperm.xlu0 %416, %v347
        %v418 = vpop.permute.xlu0 %417
        %421 = vset.pattern.permute.xlu0 0
        %422 = vperm.xlu0 %421, %v348
        %v423 = vpop.permute.xlu0 %422
        %426 = vset.pattern.permute.xlu0 0
        %427 = vperm.xlu0 %426, %v349
        %v428 = vpop.permute.xlu0 %427
        %v431 = vlaneseq
        %v432 = vshrl.u32 %v431, 7
        %v433 = vsub.s32 0, %v432
        %v434 = vrot.slane %v333, %v433
        %v435 = vlaneseq
        %v436 = vshrl.u32 %v435, 7
        %v437 = vsub.s32 1, %v436
        %v438 = vrot.slane %v333, %v437
        %v441 = vmul.f32 %v353, %v434
        %v442 = vmul.f32 %v353, %v438
        %v443 = vmul.f32 %v358, %v434
        %v444 = vmul.f32 %v358, %v438
        %v445 = vmul.f32 %v363, %v434
        %v446 = vmul.f32 %v363, %v438
        %v447 = vmul.f32 %v368, %v434
        %v448 = vmul.f32 %v368, %v438
        %v449 = vmul.f32 %v373, %v434
        %v450 = vmul.f32 %v373, %v438
        %v451 = vmul.f32 %v378, %v434
        %v452 = vmul.f32 %v378, %v438
        %v453 = vmul.f32 %v383, %v434
        %v454 = vmul.f32 %v383, %v438
        %v455 = vmul.f32 %v388, %v434
        %v456 = vmul.f32 %v388, %v438
        %v457 = vmul.f32 %v393, %v434
        %v458 = vmul.f32 %v393, %v438
        %v459 = vmul.f32 %v398, %v434
        %v460 = vmul.f32 %v398, %v438
        %v461 = vmul.f32 %v403, %v434
        %v462 = vmul.f32 %v403, %v438
        %v463 = vmul.f32 %v408, %v434
        %v464 = vmul.f32 %v408, %v438
        %v465 = vmul.f32 %v413, %v434
        %v466 = vmul.f32 %v413, %v438
        %v467 = vmul.f32 %v418, %v434
        %v468 = vmul.f32 %v418, %v438
        %v469 = vmul.f32 %v423, %v434
        %v470 = vmul.f32 %v423, %v438
        %v471 = vmul.f32 %v428, %v434
        %v472 = vmul.f32 %v428, %v438
        %v473 = vld [vmem:[%s2] sm:$0xff]
        %v474 = vld [vmem:[%s2 + $0x8] sm:$0xff]
        %v475 = vld [vmem:[%s2 + $0x10] sm:$0xff]
        %v476 = vld [vmem:[%s2 + $0x18] sm:$0xff]
        %v477 = vld [vmem:[%s2 + $0x20] sm:$0xff]
        %v478 = vld [vmem:[%s2 + $0x28] sm:$0xff]
        %v479 = vld [vmem:[%s2 + $0x30] sm:$0xff]
        %v480 = vld [vmem:[%s2 + $0x38] sm:$0xff]
        %v481 = vld [vmem:[%s2 + $0x40] sm:$0xff]
        %v482 = vld [vmem:[%s2 + $0x48] sm:$0xff]
        %v483 = vld [vmem:[%s2 + $0x50] sm:$0xff]
        %v484 = vld [vmem:[%s2 + $0x58] sm:$0xff]
        %v485 = vld [vmem:[%s2 + $0x60] sm:$0xff]
        %v486 = vld [vmem:[%s2 + $0x68] sm:$0xff]
        %v487 = vld [vmem:[%s2 + $0x70] sm:$0xff]
        %v488 = vld [vmem:[%s2 + $0x78] sm:$0xff]
        %490 = vset.pattern.permute.xlu0 0
        %491 = vperm.xlu0 %490, %v473
        %v492 = vpop.permute.xlu0 %491
        %495 = vset.pattern.permute.xlu0 0
        %496 = vperm.xlu0 %495, %v474
        %v497 = vpop.permute.xlu0 %496
        %500 = vset.pattern.permute.xlu0 0
        %501 = vperm.xlu0 %500, %v475
        %v502 = vpop.permute.xlu0 %501
        %505 = vset.pattern.permute.xlu0 0
        %506 = vperm.xlu0 %505, %v476
        %v507 = vpop.permute.xlu0 %506
        %510 = vset.pattern.permute.xlu0 0
        %511 = vperm.xlu0 %510, %v477
        %v512 = vpop.permute.xlu0 %511
        %515 = vset.pattern.permute.xlu0 0
        %516 = vperm.xlu0 %515, %v478
        %v517 = vpop.permute.xlu0 %516
        %520 = vset.pattern.permute.xlu0 0
        %521 = vperm.xlu0 %520, %v479
        %v522 = vpop.permute.xlu0 %521
        %525 = vset.pattern.permute.xlu0 0
        %526 = vperm.xlu0 %525, %v480
        %v527 = vpop.permute.xlu0 %526
        %530 = vset.pattern.permute.xlu0 0
        %531 = vperm.xlu0 %530, %v481
        %v532 = vpop.permute.xlu0 %531
        %535 = vset.pattern.permute.xlu0 0
        %536 = vperm.xlu0 %535, %v482
        %v537 = vpop.permute.xlu0 %536
        %540 = vset.pattern.permute.xlu0 0
        %541 = vperm.xlu0 %540, %v483
        %v542 = vpop.permute.xlu0 %541
        %545 = vset.pattern.permute.xlu0 0
        %546 = vperm.xlu0 %545, %v484
        %v547 = vpop.permute.xlu0 %546
        %550 = vset.pattern.permute.xlu0 0
        %551 = vperm.xlu0 %550, %v485
        %v552 = vpop.permute.xlu0 %551
        %555 = vset.pattern.permute.xlu0 0
        %556 = vperm.xlu0 %555, %v486
        %v557 = vpop.permute.xlu0 %556
        %560 = vset.pattern.permute.xlu0 0
        %561 = vperm.xlu0 %560, %v487
        %v562 = vpop.permute.xlu0 %561
        %565 = vset.pattern.permute.xlu0 0
        %566 = vperm.xlu0 %565, %v488
        %v567 = vpop.permute.xlu0 %566
        %v569 = vadd.f32 %v441, %v492
        %v570 = vadd.f32 %v442, %v492
        %v571 = vadd.f32 %v443, %v497
        %v572 = vadd.f32 %v444, %v497
        %v573 = vadd.f32 %v445, %v502
        %v574 = vadd.f32 %v446, %v502
        %v575 = vadd.f32 %v447, %v507
        %v576 = vadd.f32 %v448, %v507
        %v577 = vadd.f32 %v449, %v512
        %v578 = vadd.f32 %v450, %v512
        %v579 = vadd.f32 %v451, %v517
        %v580 = vadd.f32 %v452, %v517
        %v581 = vadd.f32 %v453, %v522
        %v582 = vadd.f32 %v454, %v522
        %v583 = vadd.f32 %v455, %v527
        %v584 = vadd.f32 %v456, %v527
        %v585 = vadd.f32 %v457, %v532
        %v586 = vadd.f32 %v458, %v532
        %v587 = vadd.f32 %v459, %v537
        %v588 = vadd.f32 %v460, %v537
        %v589 = vadd.f32 %v461, %v542
        %v590 = vadd.f32 %v462, %v542
        %v591 = vadd.f32 %v463, %v547
        %v592 = vadd.f32 %v464, %v547
        %v593 = vadd.f32 %v465, %v552
        %v594 = vadd.f32 %v466, %v552
        %v595 = vadd.f32 %v467, %v557
        %v596 = vadd.f32 %v468, %v557
        %v597 = vadd.f32 %v469, %v562
        %v598 = vadd.f32 %v470, %v562
        %v599 = vadd.f32 %v471, %v567
        %v600 = vadd.f32 %v472, %v567
        %v601 = vtanh.pop %v569
        %v602 = vtanh.pop %v570
        %v603 = vtanh.pop %v571
        %v604 = vtanh.pop %v572
        %v605 = vtanh.pop %v573
        %v606 = vtanh.pop %v574
        %v607 = vtanh.pop %v575
        %v608 = vtanh.pop %v576
        %v609 = vtanh.pop %v577
        %v610 = vtanh.pop %v578
        %v611 = vtanh.pop %v579
        %v612 = vtanh.pop %v580
        %v613 = vtanh.pop %v581
        %v614 = vtanh.pop %v582
        %v615 = vtanh.pop %v583
        %v616 = vtanh.pop %v584
        %v617 = vtanh.pop %v585
        %v618 = vtanh.pop %v586
        %v619 = vtanh.pop %v587
        %v620 = vtanh.pop %v588
        %v621 = vtanh.pop %v589
        %v622 = vtanh.pop %v590
        %v623 = vtanh.pop %v591
        %v624 = vtanh.pop %v592
        %v625 = vtanh.pop %v593
        %v626 = vtanh.pop %v594
        %v627 = vtanh.pop %v595
        %v628 = vtanh.pop %v596
        %v629 = vtanh.pop %v597
        %v630 = vtanh.pop %v598
        %v631 = vtanh.pop %v599
        %v632 = vtanh.pop %v600
        %v633 = vld [vmem:[%s3] sm:$0xf]
        %v634 = vld [vmem:[%s3 + $0x4] sm:$0xf]
        %v635 = vld [vmem:[%s3 + $0x8] sm:$0xf]
        %v636 = vld [vmem:[%s3 + $0xc] sm:$0xf]
        %v637 = vld [vmem:[%s3 + $0x10] sm:$0xf]
        %v638 = vld [vmem:[%s3 + $0x14] sm:$0xf]
        %v639 = vld [vmem:[%s3 + $0x18] sm:$0xf]
        %v640 = vld [vmem:[%s3 + $0x1c] sm:$0xf]
        %v641 = vld [vmem:[%s3 + $0x20] sm:$0xf]
        %v642 = vld [vmem:[%s3 + $0x24] sm:$0xf]
        %v643 = vld [vmem:[%s3 + $0x28] sm:$0xf]
        %v644 = vld [vmem:[%s3 + $0x2c] sm:$0xf]
        %v645 = vld [vmem:[%s3 + $0x30] sm:$0xf]
        %v646 = vld [vmem:[%s3 + $0x34] sm:$0xf]
        %v647 = vld [vmem:[%s3 + $0x38] sm:$0xf]
        %v648 = vld [vmem:[%s3 + $0x3c] sm:$0xf]
        %v649 = vpack.c.bf16 %v603, %v601
        %v650 = vpack.c.bf16 %v604, %v602
        %v651 = vpack.c.bf16 %v607, %v605
        %v652 = vpack.c.bf16 %v608, %v606
        %v653 = vpack.c.bf16 %v611, %v609
        %v654 = vpack.c.bf16 %v612, %v610
        %v655 = vpack.c.bf16 %v615, %v613
        %v656 = vpack.c.bf16 %v616, %v614
        %v657 = vpack.c.bf16 %v619, %v617
        %v658 = vpack.c.bf16 %v620, %v618
        %v659 = vpack.c.bf16 %v623, %v621
        %v660 = vpack.c.bf16 %v624, %v622
        %v661 = vpack.c.bf16 %v627, %v625
        %v662 = vpack.c.bf16 %v628, %v626
        %v663 = vpack.c.bf16 %v631, %v629
        %v664 = vpack.c.bf16 %v632, %v630
        %v665 = vld [vmem:[%s4] sm:$0xff]
        %v666 = vld [vmem:[%s4 + $0x8] sm:$0xff]
        %v667 = vld [vmem:[%s4 + $0x10] sm:$0xff]
        %v668 = vld [vmem:[%s4 + $0x18] sm:$0xff]
        %v669 = vld [vmem:[%s4 + $0x20] sm:$0xff]
        %v670 = vld [vmem:[%s4 + $0x28] sm:$0xff]
        %v671 = vld [vmem:[%s4 + $0x30] sm:$0xff]
        %v672 = vld [vmem:[%s4 + $0x38] sm:$0xff]
        %v673 = vld [vmem:[%s4 + $0x40] sm:$0xff]
        %v674 = vld [vmem:[%s4 + $0x48] sm:$0xff]
        %v675 = vld [vmem:[%s4 + $0x50] sm:$0xff]
        %v676 = vld [vmem:[%s4 + $0x58] sm:$0xff]
        %v677 = vld [vmem:[%s4 + $0x60] sm:$0xff]
        %v678 = vld [vmem:[%s4 + $0x68] sm:$0xff]
        %v679 = vld [vmem:[%s4 + $0x70] sm:$0xff]
        %v680 = vld [vmem:[%s4 + $0x78] sm:$0xff]
        %682 = vset.pattern.permute.xlu0 0
        %683 = vperm.xlu0 %682, %v665
        %v684 = vpop.permute.xlu0 %683
        %687 = vset.pattern.permute.xlu0 0
        %688 = vperm.xlu0 %687, %v666
        %v689 = vpop.permute.xlu0 %688
        %692 = vset.pattern.permute.xlu0 0
        %693 = vperm.xlu0 %692, %v667
        %v694 = vpop.permute.xlu0 %693
        %697 = vset.pattern.permute.xlu0 0
        %698 = vperm.xlu0 %697, %v668
        %v699 = vpop.permute.xlu0 %698
        %702 = vset.pattern.permute.xlu0 0
        %703 = vperm.xlu0 %702, %v669
        %v704 = vpop.permute.xlu0 %703
        %707 = vset.pattern.permute.xlu0 0
        %708 = vperm.xlu0 %707, %v670
        %v709 = vpop.permute.xlu0 %708
        %712 = vset.pattern.permute.xlu0 0
        %713 = vperm.xlu0 %712, %v671
        %v714 = vpop.permute.xlu0 %713
        %717 = vset.pattern.permute.xlu0 0
        %718 = vperm.xlu0 %717, %v672
        %v719 = vpop.permute.xlu0 %718
        %722 = vset.pattern.permute.xlu0 0
        %723 = vperm.xlu0 %722, %v673
        %v724 = vpop.permute.xlu0 %723
        %727 = vset.pattern.permute.xlu0 0
        %728 = vperm.xlu0 %727, %v674
        %v729 = vpop.permute.xlu0 %728
        %732 = vset.pattern.permute.xlu0 0
        %733 = vperm.xlu0 %732, %v675
        %v734 = vpop.permute.xlu0 %733
        %737 = vset.pattern.permute.xlu0 0
        %738 = vperm.xlu0 %737, %v676
        %v739 = vpop.permute.xlu0 %738
        %742 = vset.pattern.permute.xlu0 0
        %743 = vperm.xlu0 %742, %v677
        %v744 = vpop.permute.xlu0 %743
        %747 = vset.pattern.permute.xlu0 0
        %748 = vperm.xlu0 %747, %v678
        %v749 = vpop.permute.xlu0 %748
        %752 = vset.pattern.permute.xlu0 0
        %753 = vperm.xlu0 %752, %v679
        %v754 = vpop.permute.xlu0 %753
        %757 = vset.pattern.permute.xlu0 0
        %758 = vperm.xlu0 %757, %v680
        %v759 = vpop.permute.xlu0 %758
        %v777 = vunpack.c.l.b16 %v633
        %v778 = vunpack.c.l.b16 %v634
        %v779 = vunpack.c.l.b16 %v635
        %v780 = vunpack.c.l.b16 %v636
        %v781 = vunpack.c.l.b16 %v637
        %v782 = vunpack.c.l.b16 %v638
        %v783 = vunpack.c.l.b16 %v639
        %v784 = vunpack.c.l.b16 %v640
        %v785 = vunpack.c.l.b16 %v641
        %v786 = vunpack.c.l.b16 %v642
        %v787 = vunpack.c.l.b16 %v643
        %v788 = vunpack.c.l.b16 %v644
        %v789 = vunpack.c.l.b16 %v645
        %v790 = vunpack.c.l.b16 %v646
        %v791 = vunpack.c.l.b16 %v647
        %v792 = vunpack.c.l.b16 %v648
        %v793 = vpack.c.b16 %v778, %v777
        %v794 = vpack.c.b16 %v780, %v779
        %v795 = vpack.c.b16 %v782, %v781
        %v796 = vpack.c.b16 %v784, %v783
        %v797 = vpack.c.b16 %v786, %v785
        %v798 = vpack.c.b16 %v788, %v787
        %v799 = vpack.c.b16 %v790, %v789
        %v800 = vpack.c.b16 %v792, %v791
        %809 = vmatprep.subr.bf16.mxu0 %v664
        %810 = vmatpush1.bf16.msra.mxu0 %v663
        %811 = vmatprep.subr.bf16.mxu0 %v662
        %812 = vmatpush1.bf16.msra.mxu0 %v661
        %813 = vmatprep.subr.bf16.mxu0 %v660
        %814 = vmatpush1.bf16.msra.mxu0 %v659
        %815 = vmatprep.subr.bf16.mxu0 %v658
        %816 = vmatpush1.bf16.msra.mxu0 %v657
        %817 = vmatprep.subr.bf16.mxu0 %v656
        %818 = vmatpush1.bf16.msra.mxu0 %v655
        %819 = vmatprep.subr.bf16.mxu0 %v654
        %820 = vmatpush1.bf16.msra.mxu0 %v653
        %821 = vmatprep.subr.bf16.mxu0 %v652
        %822 = vmatpush1.bf16.msra.mxu0 %v651
        %823 = vmatprep.subr.bf16.mxu0 %v650
        %824 = vmatpush1.bf16.msra.mxu0 %v649
        %825 = vmatprep.subr.bf16.mxu0 0
        %826 = vmatpush2.bf16.msra.mxu0 0
        %827 = vmatprep.subr.bf16.mxu0 0
        %828 = vmatpush2.bf16.msra.mxu0 0
        %829 = vmatprep.subr.bf16.mxu0 0
        %830 = vmatpush2.bf16.msra.mxu0 0
        %831 = vmatprep.subr.bf16.mxu0 0
        %832 = vmatpush2.bf16.msra.mxu0 0
        %833 = vmatprep.subr.bf16.mxu0 0
        %834 = vmatpush2.bf16.msra.mxu0 0
        %835 = vmatprep.subr.bf16.mxu0 0
        %836 = vmatpush2.bf16.msra.mxu0 0
        %837 = vmatprep.subr.bf16.mxu0 0
        %838 = vmatpush2.bf16.msra.mxu0 0
        %839 = vmatprep.subr.bf16.mxu0 0
        %840 = vmatpush2.bf16.msra.mxu0 0
        %841 = vmatprep.mubr.bf16.mxu0 0
        %842 = vmatmul.mubr.bf16.gmra.mxu0 %v793
        %v843 = vpop.f32.mrf.mxu0
        %v844 = vadd.f32 %v684, %v843
        %v845 = vpop.f32.mrf.mxu0
        %v846 = vadd.f32 %v684, %v845
        %v847 = vpop.f32.mrf.mxu0
        %v848 = vadd.f32 %v689, %v847
        %v849 = vpop.f32.mrf.mxu0
        %v850 = vadd.f32 %v689, %v849
        %851 = vmatprep.mubr.bf16.mxu0 0
        %852 = vmatmul.mubr.bf16.gmra.mxu0 %v794
        %v853 = vpop.f32.mrf.mxu0
        %v854 = vadd.f32 %v694, %v853
        %v855 = vpop.f32.mrf.mxu0
        %v856 = vadd.f32 %v694, %v855
        %v857 = vpop.f32.mrf.mxu0
        %v858 = vadd.f32 %v699, %v857
        %v859 = vpop.f32.mrf.mxu0
        %v860 = vadd.f32 %v699, %v859
        %861 = vmatprep.mubr.bf16.mxu0 0
        %862 = vmatmul.mubr.bf16.gmra.mxu0 %v795
        %v863 = vpop.f32.mrf.mxu0
        %v864 = vadd.f32 %v704, %v863
        %v865 = vpop.f32.mrf.mxu0
        %v866 = vadd.f32 %v704, %v865
        %v867 = vpop.f32.mrf.mxu0
        %v868 = vadd.f32 %v709, %v867
        %v869 = vpop.f32.mrf.mxu0
        %v870 = vadd.f32 %v709, %v869
        %871 = vmatprep.mubr.bf16.mxu0 0
        %872 = vmatmul.mubr.bf16.gmra.mxu0 %v796
        %v873 = vpop.f32.mrf.mxu0
        %v874 = vadd.f32 %v714, %v873
        %v875 = vpop.f32.mrf.mxu0
        %v876 = vadd.f32 %v714, %v875
        %v877 = vpop.f32.mrf.mxu0
        %v878 = vadd.f32 %v719, %v877
        %v879 = vpop.f32.mrf.mxu0
        %v880 = vadd.f32 %v719, %v879
        %881 = vmatprep.mubr.bf16.mxu0 0
        %882 = vmatmul.mubr.bf16.gmra.mxu0 %v797
        %v883 = vpop.f32.mrf.mxu0
        %v884 = vadd.f32 %v724, %v883
        %v885 = vpop.f32.mrf.mxu0
        %v886 = vadd.f32 %v724, %v885
        %v887 = vpop.f32.mrf.mxu0
        %v888 = vadd.f32 %v729, %v887
        %v889 = vpop.f32.mrf.mxu0
        %v890 = vadd.f32 %v729, %v889
        %891 = vmatprep.mubr.bf16.mxu0 0
        %892 = vmatmul.mubr.bf16.gmra.mxu0 %v798
        %v893 = vpop.f32.mrf.mxu0
        %v894 = vadd.f32 %v734, %v893
        %v895 = vpop.f32.mrf.mxu0
        %v896 = vadd.f32 %v734, %v895
        %v897 = vpop.f32.mrf.mxu0
        %v898 = vadd.f32 %v739, %v897
        %v899 = vpop.f32.mrf.mxu0
        %v900 = vadd.f32 %v739, %v899
        %901 = vmatprep.mubr.bf16.mxu0 0
        %902 = vmatmul.mubr.bf16.gmra.mxu0 %v799
        %v903 = vpop.f32.mrf.mxu0
        %v904 = vadd.f32 %v744, %v903
        %v905 = vpop.f32.mrf.mxu0
        %v906 = vadd.f32 %v744, %v905
        %v907 = vpop.f32.mrf.mxu0
        %v908 = vadd.f32 %v749, %v907
        %v909 = vpop.f32.mrf.mxu0
        %v910 = vadd.f32 %v749, %v909
        %911 = vmatprep.mubr.bf16.mxu0 0
        %912 = vmatmul.mubr.bf16.gmra.mxu0 %v800
        %v913 = vpop.f32.mrf.mxu0
        %v914 = vadd.f32 %v754, %v913
        %v915 = vpop.f32.mrf.mxu0
        %v916 = vadd.f32 %v754, %v915
        %v917 = vpop.f32.mrf.mxu0
        %v918 = vadd.f32 %v759, %v917
        %v919 = vpop.f32.mrf.mxu0
        %v920 = vadd.f32 %v759, %v919
        %921 = vdwg.mxu0
        %v922 = vtanh.pop %v844
        %v923 = vtanh.pop %v846
        %v924 = vtanh.pop %v848
        %v925 = vtanh.pop %v850
        %v926 = vtanh.pop %v854
        %v927 = vtanh.pop %v856
        %v928 = vtanh.pop %v858
        %v929 = vtanh.pop %v860
        %v930 = vtanh.pop %v864
        %v931 = vtanh.pop %v866
        %v932 = vtanh.pop %v868
        %v933 = vtanh.pop %v870
        %v934 = vtanh.pop %v874
        %v935 = vtanh.pop %v876
        %v936 = vtanh.pop %v878
        %v937 = vtanh.pop %v880
        %v938 = vtanh.pop %v884
        %v939 = vtanh.pop %v886
        %v940 = vtanh.pop %v888
        %v941 = vtanh.pop %v890
        %v942 = vtanh.pop %v894
        %v943 = vtanh.pop %v896
        %v944 = vtanh.pop %v898
        %v945 = vtanh.pop %v900
        %v946 = vtanh.pop %v904
        %v947 = vtanh.pop %v906
        %v948 = vtanh.pop %v908
        %v949 = vtanh.pop %v910
        %v950 = vtanh.pop %v914
        %v951 = vtanh.pop %v916
        %v952 = vtanh.pop %v918
        %v953 = vtanh.pop %v920
        %v954 = vld [vmem:[%s5] sm:$0xf]
        %v955 = vld [vmem:[%s5 + $0x4] sm:$0xf]
        %v956 = vld [vmem:[%s5 + $0x8] sm:$0xf]
        %v957 = vld [vmem:[%s5 + $0xc] sm:$0xf]
        %v958 = vld [vmem:[%s5 + $0x10] sm:$0xf]
        %v959 = vld [vmem:[%s5 + $0x14] sm:$0xf]
        %v960 = vld [vmem:[%s5 + $0x18] sm:$0xf]
        %v961 = vld [vmem:[%s5 + $0x1c] sm:$0xf]
        %v962 = vld [vmem:[%s5 + $0x20] sm:$0xf]
        %v963 = vld [vmem:[%s5 + $0x24] sm:$0xf]
        %v964 = vld [vmem:[%s5 + $0x28] sm:$0xf]
        %v965 = vld [vmem:[%s5 + $0x2c] sm:$0xf]
        %v966 = vld [vmem:[%s5 + $0x30] sm:$0xf]
        %v967 = vld [vmem:[%s5 + $0x34] sm:$0xf]
        %v968 = vld [vmem:[%s5 + $0x38] sm:$0xf]
        %v969 = vld [vmem:[%s5 + $0x3c] sm:$0xf]
        %v970 = vpack.c.bf16 %v924, %v922
        %v971 = vpack.c.bf16 %v925, %v923
        %v972 = vpack.c.bf16 %v928, %v926
        %v973 = vpack.c.bf16 %v929, %v927
        %v974 = vpack.c.bf16 %v932, %v930
        %v975 = vpack.c.bf16 %v933, %v931
        %v976 = vpack.c.bf16 %v936, %v934
        %v977 = vpack.c.bf16 %v937, %v935
        %v978 = vpack.c.bf16 %v940, %v938
        %v979 = vpack.c.bf16 %v941, %v939
        %v980 = vpack.c.bf16 %v944, %v942
        %v981 = vpack.c.bf16 %v945, %v943
        %v982 = vpack.c.bf16 %v948, %v946
        %v983 = vpack.c.bf16 %v949, %v947
        %v984 = vpack.c.bf16 %v952, %v950
        %v985 = vpack.c.bf16 %v953, %v951
        %v986 = vld [vmem:[%s6] sm:$0xff]
        %v987 = vld [vmem:[%s6 + $0x8] sm:$0xff]
        %v988 = vld [vmem:[%s6 + $0x10] sm:$0xff]
        %v989 = vld [vmem:[%s6 + $0x18] sm:$0xff]
        %v990 = vld [vmem:[%s6 + $0x20] sm:$0xff]
        %v991 = vld [vmem:[%s6 + $0x28] sm:$0xff]
        %v992 = vld [vmem:[%s6 + $0x30] sm:$0xff]
        %v993 = vld [vmem:[%s6 + $0x38] sm:$0xff]
        %v994 = vld [vmem:[%s6 + $0x40] sm:$0xff]
        %v995 = vld [vmem:[%s6 + $0x48] sm:$0xff]
        %v996 = vld [vmem:[%s6 + $0x50] sm:$0xff]
        %v997 = vld [vmem:[%s6 + $0x58] sm:$0xff]
        %v998 = vld [vmem:[%s6 + $0x60] sm:$0xff]
        %v999 = vld [vmem:[%s6 + $0x68] sm:$0xff]
        %v1000 = vld [vmem:[%s6 + $0x70] sm:$0xff]
        %v1001 = vld [vmem:[%s6 + $0x78] sm:$0xff]
        %1003 = vset.pattern.permute.xlu0 0
        %1004 = vperm.xlu0 %1003, %v986
        %v1005 = vpop.permute.xlu0 %1004
        %1008 = vset.pattern.permute.xlu0 0
        %1009 = vperm.xlu0 %1008, %v987
        %v1010 = vpop.permute.xlu0 %1009
        %1013 = vset.pattern.permute.xlu0 0
        %1014 = vperm.xlu0 %1013, %v988
        %v1015 = vpop.permute.xlu0 %1014
        %1018 = vset.pattern.permute.xlu0 0
        %1019 = vperm.xlu0 %1018, %v989
        %v1020 = vpop.permute.xlu0 %1019
        %1023 = vset.pattern.permute.xlu0 0
        %1024 = vperm.xlu0 %1023, %v990
        %v1025 = vpop.permute.xlu0 %1024
        %1028 = vset.pattern.permute.xlu0 0
        %1029 = vperm.xlu0 %1028, %v991
        %v1030 = vpop.permute.xlu0 %1029
        %1033 = vset.pattern.permute.xlu0 0
        %1034 = vperm.xlu0 %1033, %v992
        %v1035 = vpop.permute.xlu0 %1034
        %1038 = vset.pattern.permute.xlu0 0
        %1039 = vperm.xlu0 %1038, %v993
        %v1040 = vpop.permute.xlu0 %1039
        %1043 = vset.pattern.permute.xlu0 0
        %1044 = vperm.xlu0 %1043, %v994
        %v1045 = vpop.permute.xlu0 %1044
        %1048 = vset.pattern.permute.xlu0 0
        %1049 = vperm.xlu0 %1048, %v995
        %v1050 = vpop.permute.xlu0 %1049
        %1053 = vset.pattern.permute.xlu0 0
        %1054 = vperm.xlu0 %1053, %v996
        %v1055 = vpop.permute.xlu0 %1054
        %1058 = vset.pattern.permute.xlu0 0
        %1059 = vperm.xlu0 %1058, %v997
        %v1060 = vpop.permute.xlu0 %1059
        %1063 = vset.pattern.permute.xlu0 0
        %1064 = vperm.xlu0 %1063, %v998
        %v1065 = vpop.permute.xlu0 %1064
        %1068 = vset.pattern.permute.xlu0 0
        %1069 = vperm.xlu0 %1068, %v999
        %v1070 = vpop.permute.xlu0 %1069
        %1073 = vset.pattern.permute.xlu0 0
        %1074 = vperm.xlu0 %1073, %v1000
        %v1075 = vpop.permute.xlu0 %1074
        %1078 = vset.pattern.permute.xlu0 0
        %1079 = vperm.xlu0 %1078, %v1001
        %v1080 = vpop.permute.xlu0 %1079
        %v1098 = vunpack.c.l.b16 %v954
        %v1099 = vunpack.c.l.b16 %v955
        %v1100 = vunpack.c.l.b16 %v956
        %v1101 = vunpack.c.l.b16 %v957
        %v1102 = vunpack.c.l.b16 %v958
        %v1103 = vunpack.c.l.b16 %v959
        %v1104 = vunpack.c.l.b16 %v960
        %v1105 = vunpack.c.l.b16 %v961
        %v1106 = vunpack.c.l.b16 %v962
        %v1107 = vunpack.c.l.b16 %v963
        %v1108 = vunpack.c.l.b16 %v964
        %v1109 = vunpack.c.l.b16 %v965
        %v1110 = vunpack.c.l.b16 %v966
        %v1111 = vunpack.c.l.b16 %v967
        %v1112 = vunpack.c.l.b16 %v968
        %v1113 = vunpack.c.l.b16 %v969
        %v1114 = vpack.c.b16 %v1099, %v1098
        %v1115 = vpack.c.b16 %v1101, %v1100
        %v1116 = vpack.c.b16 %v1103, %v1102
        %v1117 = vpack.c.b16 %v1105, %v1104
        %v1118 = vpack.c.b16 %v1107, %v1106
        %v1119 = vpack.c.b16 %v1109, %v1108
        %v1120 = vpack.c.b16 %v1111, %v1110
        %v1121 = vpack.c.b16 %v1113, %v1112
        %1130 = vmatprep.subr.bf16.mxu0 %v985
        %1131 = vmatpush1.bf16.msra.mxu0 %v984
        %1132 = vmatprep.subr.bf16.mxu0 %v983
        %1133 = vmatpush1.bf16.msra.mxu0 %v982
        %1134 = vmatprep.subr.bf16.mxu0 %v981
        %1135 = vmatpush1.bf16.msra.mxu0 %v980
        %1136 = vmatprep.subr.bf16.mxu0 %v979
        %1137 = vmatpush1.bf16.msra.mxu0 %v978
        %1138 = vmatprep.subr.bf16.mxu0 %v977
        %1139 = vmatpush1.bf16.msra.mxu0 %v976
        %1140 = vmatprep.subr.bf16.mxu0 %v975
        %1141 = vmatpush1.bf16.msra.mxu0 %v974
        %1142 = vmatprep.subr.bf16.mxu0 %v973
        %1143 = vmatpush1.bf16.msra.mxu0 %v972
        %1144 = vmatprep.subr.bf16.mxu0 %v971
        %1145 = vmatpush1.bf16.msra.mxu0 %v970
        %1146 = vmatprep.subr.bf16.mxu0 0
        %1147 = vmatpush2.bf16.msra.mxu0 0
        %1148 = vmatprep.subr.bf16.mxu0 0
        %1149 = vmatpush2.bf16.msra.mxu0 0
        %1150 = vmatprep.subr.bf16.mxu0 0
        %1151 = vmatpush2.bf16.msra.mxu0 0
        %1152 = vmatprep.subr.bf16.mxu0 0
        %1153 = vmatpush2.bf16.msra.mxu0 0
        %1154 = vmatprep.subr.bf16.mxu0 0
        %1155 = vmatpush2.bf16.msra.mxu0 0
        %1156 = vmatprep.subr.bf16.mxu0 0
        %1157 = vmatpush2.bf16.msra.mxu0 0
        %1158 = vmatprep.subr.bf16.mxu0 0
        %1159 = vmatpush2.bf16.msra.mxu0 0
        %1160 = vmatprep.subr.bf16.mxu0 0
        %1161 = vmatpush2.bf16.msra.mxu0 0
        %1162 = vmatprep.mubr.bf16.mxu0 0
        %1163 = vmatmul.mubr.bf16.gmra.mxu0 %v1114
        %v1164 = vpop.f32.mrf.mxu0
        %v1165 = vadd.f32 %v1005, %v1164
        %v1166 = vpop.f32.mrf.mxu0
        %v1167 = vadd.f32 %v1005, %v1166
        %v1168 = vpop.f32.mrf.mxu0
        %v1169 = vadd.f32 %v1010, %v1168
        %v1170 = vpop.f32.mrf.mxu0
        %v1171 = vadd.f32 %v1010, %v1170
        %1172 = vmatprep.mubr.bf16.mxu0 0
        %1173 = vmatmul.mubr.bf16.gmra.mxu0 %v1115
        %v1174 = vpop.f32.mrf.mxu0
        %v1175 = vadd.f32 %v1015, %v1174
        %v1176 = vpop.f32.mrf.mxu0
        %v1177 = vadd.f32 %v1015, %v1176
        %v1178 = vpop.f32.mrf.mxu0
        %v1179 = vadd.f32 %v1020, %v1178
        %v1180 = vpop.f32.mrf.mxu0
        %v1181 = vadd.f32 %v1020, %v1180
        %1182 = vmatprep.mubr.bf16.mxu0 0
        %1183 = vmatmul.mubr.bf16.gmra.mxu0 %v1116
        %v1184 = vpop.f32.mrf.mxu0
        %v1185 = vadd.f32 %v1025, %v1184
        %v1186 = vpop.f32.mrf.mxu0
        %v1187 = vadd.f32 %v1025, %v1186
        %v1188 = vpop.f32.mrf.mxu0
        %v1189 = vadd.f32 %v1030, %v1188
        %v1190 = vpop.f32.mrf.mxu0
        %v1191 = vadd.f32 %v1030, %v1190
        %1192 = vmatprep.mubr.bf16.mxu0 0
        %1193 = vmatmul.mubr.bf16.gmra.mxu0 %v1117
        %v1194 = vpop.f32.mrf.mxu0
        %v1195 = vadd.f32 %v1035, %v1194
        %v1196 = vpop.f32.mrf.mxu0
        %v1197 = vadd.f32 %v1035, %v1196
        %v1198 = vpop.f32.mrf.mxu0
        %v1199 = vadd.f32 %v1040, %v1198
        %v1200 = vpop.f32.mrf.mxu0
        %v1201 = vadd.f32 %v1040, %v1200
        %1202 = vmatprep.mubr.bf16.mxu0 0
        %1203 = vmatmul.mubr.bf16.gmra.mxu0 %v1118
        %v1204 = vpop.f32.mrf.mxu0
        %v1205 = vadd.f32 %v1045, %v1204
        %v1206 = vpop.f32.mrf.mxu0
        %v1207 = vadd.f32 %v1045, %v1206
        %v1208 = vpop.f32.mrf.mxu0
        %v1209 = vadd.f32 %v1050, %v1208
        %v1210 = vpop.f32.mrf.mxu0
        %v1211 = vadd.f32 %v1050, %v1210
        %1212 = vmatprep.mubr.bf16.mxu0 0
        %1213 = vmatmul.mubr.bf16.gmra.mxu0 %v1119
        %v1214 = vpop.f32.mrf.mxu0
        %v1215 = vadd.f32 %v1055, %v1214
        %v1216 = vpop.f32.mrf.mxu0
        %v1217 = vadd.f32 %v1055, %v1216
        %v1218 = vpop.f32.mrf.mxu0
        %v1219 = vadd.f32 %v1060, %v1218
        %v1220 = vpop.f32.mrf.mxu0
        %v1221 = vadd.f32 %v1060, %v1220
        %1222 = vmatprep.mubr.bf16.mxu0 0
        %1223 = vmatmul.mubr.bf16.gmra.mxu0 %v1120
        %v1224 = vpop.f32.mrf.mxu0
        %v1225 = vadd.f32 %v1065, %v1224
        %v1226 = vpop.f32.mrf.mxu0
        %v1227 = vadd.f32 %v1065, %v1226
        %v1228 = vpop.f32.mrf.mxu0
        %v1229 = vadd.f32 %v1070, %v1228
        %v1230 = vpop.f32.mrf.mxu0
        %v1231 = vadd.f32 %v1070, %v1230
        %1232 = vmatprep.mubr.bf16.mxu0 0
        %1233 = vmatmul.mubr.bf16.gmra.mxu0 %v1121
        %v1234 = vpop.f32.mrf.mxu0
        %v1235 = vadd.f32 %v1075, %v1234
        %v1236 = vpop.f32.mrf.mxu0
        %v1237 = vadd.f32 %v1075, %v1236
        %v1238 = vpop.f32.mrf.mxu0
        %v1239 = vadd.f32 %v1080, %v1238
        %v1240 = vpop.f32.mrf.mxu0
        %v1241 = vadd.f32 %v1080, %v1240
        %1242 = vdwg.mxu0
        %v1243 = vtanh.pop %v1165
        %v1244 = vtanh.pop %v1167
        %v1245 = vtanh.pop %v1169
        %v1246 = vtanh.pop %v1171
        %v1247 = vtanh.pop %v1175
        %v1248 = vtanh.pop %v1177
        %v1249 = vtanh.pop %v1179
        %v1250 = vtanh.pop %v1181
        %v1251 = vtanh.pop %v1185
        %v1252 = vtanh.pop %v1187
        %v1253 = vtanh.pop %v1189
        %v1254 = vtanh.pop %v1191
        %v1255 = vtanh.pop %v1195
        %v1256 = vtanh.pop %v1197
        %v1257 = vtanh.pop %v1199
        %v1258 = vtanh.pop %v1201
        %v1259 = vtanh.pop %v1205
        %v1260 = vtanh.pop %v1207
        %v1261 = vtanh.pop %v1209
        %v1262 = vtanh.pop %v1211
        %v1263 = vtanh.pop %v1215
        %v1264 = vtanh.pop %v1217
        %v1265 = vtanh.pop %v1219
        %v1266 = vtanh.pop %v1221
        %v1267 = vtanh.pop %v1225
        %v1268 = vtanh.pop %v1227
        %v1269 = vtanh.pop %v1229
        %v1270 = vtanh.pop %v1231
        %v1271 = vtanh.pop %v1235
        %v1272 = vtanh.pop %v1237
        %v1273 = vtanh.pop %v1239
        %v1274 = vtanh.pop %v1241
        %v1275 = vld [vmem:[%s7] sm:$0x1]
        %v1276 = vpack.c.bf16 %v1245, %v1243
        %v1277 = vpack.c.bf16 %v1246, %v1244
        %v1278 = vpack.c.bf16 %v1249, %v1247
        %v1279 = vpack.c.bf16 %v1250, %v1248
        %v1280 = vpack.c.bf16 %v1253, %v1251
        %v1281 = vpack.c.bf16 %v1254, %v1252
        %v1282 = vpack.c.bf16 %v1257, %v1255
        %v1283 = vpack.c.bf16 %v1258, %v1256
        %v1284 = vpack.c.bf16 %v1261, %v1259
        %v1285 = vpack.c.bf16 %v1262, %v1260
        %v1286 = vpack.c.bf16 %v1265, %v1263
        %v1287 = vpack.c.bf16 %v1266, %v1264
        %v1288 = vpack.c.bf16 %v1269, %v1267
        %v1289 = vpack.c.bf16 %v1270, %v1268
        %v1290 = vpack.c.bf16 %v1273, %v1271
        %v1291 = vpack.c.bf16 %v1274, %v1272
        %s1292 = sld [smem:[#allocation2]]
        %v1293 = vstv %s1292
        %1294 = vmatprep.subr.bf16.mxu0 %v1291
        %1295 = vmatpush1.bf16.msra.mxu0 %v1290
        %1296 = vmatprep.subr.bf16.mxu0 %v1289
        %1297 = vmatpush1.bf16.msra.mxu0 %v1288
        %1298 = vmatprep.subr.bf16.mxu0 %v1287
        %1299 = vmatpush1.bf16.msra.mxu0 %v1286
        %1300 = vmatprep.subr.bf16.mxu0 %v1285
        %1301 = vmatpush1.bf16.msra.mxu0 %v1284
        %1302 = vmatprep.subr.bf16.mxu0 %v1283
        %1303 = vmatpush1.bf16.msra.mxu0 %v1282
        %1304 = vmatprep.subr.bf16.mxu0 %v1281
        %1305 = vmatpush1.bf16.msra.mxu0 %v1280
        %1306 = vmatprep.subr.bf16.mxu0 %v1279
        %1307 = vmatpush1.bf16.msra.mxu0 %v1278
        %1308 = vmatprep.subr.bf16.mxu0 %v1277
        %1309 = vmatpush1.bf16.msra.mxu0 %v1276
        %1310 = vmatprep.subr.bf16.mxu0 0
        %1311 = vmatpush2.bf16.msra.mxu0 0
        %1312 = vmatprep.subr.bf16.mxu0 0
        %1313 = vmatpush2.bf16.msra.mxu0 0
        %1314 = vmatprep.subr.bf16.mxu0 0
        %1315 = vmatpush2.bf16.msra.mxu0 0
        %1316 = vmatprep.subr.bf16.mxu0 0
        %1317 = vmatpush2.bf16.msra.mxu0 0
        %1318 = vmatprep.subr.bf16.mxu0 0
        %1319 = vmatpush2.bf16.msra.mxu0 0
        %1320 = vmatprep.subr.bf16.mxu0 0
        %1321 = vmatpush2.bf16.msra.mxu0 0
        %1322 = vmatprep.subr.bf16.mxu0 0
        %1323 = vmatpush2.bf16.msra.mxu0 0
        %1324 = vmatprep.subr.bf16.mxu0 0
        %1325 = vmatpush2.bf16.msra.mxu0 0
        %1326 = vmatprep.mubr.bf16.mxu0 0
        %1327 = vmatmul.mubr.bf16.gmra.mxu0 %v1275
        %v1328 = vpop.f32.mrf.mxu0
        %v1329 = vadd.f32 %v1293, %v1328
        %v1330 = vpop.f32.mrf.mxu0
        %v1331 = vadd.f32 %v1293, %v1330
        %v1332 = vpop.f32.mrf.mxu0
        %v1333 = vpop.f32.mrf.mxu0
        %1334 = vdwg.mxu0
        %v1337 = vcombine.low %v1329, %v1331
        %v1339 = vunpack.c.l.s4 1966171168
        %v1340 = vunpack.c.0.s8 %v1339
        %v1341 = vlaneseq
        %v1342 = vshrl.u32 %v1341, 7
        %v1343 = vsub.s32 %v1340, %v1342
        %v1344 = vrot.slane %v1337, %v1343
        %v1346 = vunpack.c.l.s4 1966171168
        %v1347 = vunpack.c.0.s8 %v1346
        %v1348 = vlaneseq
        %v1349 = vshrl.u32 %v1348, 7
        %v1350 = vsub.s32 %v1347, %v1349
        %v1351 = vrot.slane %v1344, %v1350
        %v1353 = vlaneseq
        %vm1354 = vcmp.ge.s32.totalorder %v1353, 0
        %vm1355 = vcmp.lt.s32.totalorder %v1353, 256
        %vm1356 = vmand %vm1354, %vm1355
        %1357 = vst.msk [vmem:[%s325] sm:$0x3] %vm1356, %v1351
        %s1358 = sand.u32 %s226, 1
        %s1359 = scalar_lea.sflag [#allocation4], %s1358
        %s1360 = sand.u32 %s226, 1
        %s1361 = smul.addr %s1360, 2
        %s1362 = scalar_lea.vmem [#allocation3], %s1361
        // Predicated region
        $region57: #{value_function_forward.1} parent=55 // pred_check
          %p1363 = pneg %p236
        $region58: #{value_function_forward.1} parent=55 // pred_check_branch
          %1365 = sbr.rel (%p1363) target = $region60
        $region59: #{value_function_forward.1} parent=55 // pred_region
          %s1366 = smul.u32 2, %s24
          %s1368 = ssub.s32 32, 32
          %1369 = vsyncadd %s1359, %s1368
          %s1370 = smul.addr %s1366, 16
          %s1371 = scalar_lea.hbm %s9, %s1370
          %s1373 = sshll.u32 %s1362, 4
          %s1374 = int_to_ptr.vmem [resolvable:$true] %s1373
          %1376 = dma.vmem_to_hbm [thread:$0]  %s1374, 32, %s1371, %s1359
        $region60: #{value_function_forward.1} parent=55 // pred_fallthru
          _
      $region56: #{value_function_forward.1} parent=5 // pred_fallthru
        _
      %p1377 = scmp.le.s32.totalorder 2, %s19
      // Predicated region
      $region61: #{value_function_forward.1} parent=5 // pred_check
        %p1378 = pneg %p1377
      $region62: #{value_function_forward.1} parent=5 // pred_check_branch
        %1380 = sbr.rel (%p1378) target = $region64
      $region63: #{value_function_forward.1} parent=5 // pred_region
        %s1381 = ssub.s32 %s19, 2
        // Predicated region
        $region65: #{value_function_forward.1} parent=63 // pred_check
          %p1382 = pneg %p242
        $region66: #{value_function_forward.1} parent=63 // pred_check_branch
          %1384 = sbr.rel (%p1382) target = $region68
        $region67: #{value_function_forward.1} parent=63 // pred_region
          %s1385 = sand.u32 %s227, 1
          %s1386 = scalar_lea.sflag [#allocation4], %s1385
          %s1387 = sand.u32 %s227, 1
          %s1388 = smul.addr %s1387, 2
          %s1389 = scalar_lea.vmem [#allocation3], %s1388
          %1390 = dma.done %s1386, 32
        $region68: #{value_function_forward.1} parent=63 // pred_fallthru
          _
      $region64: #{value_function_forward.1} parent=5 // pred_fallthru
        _
    $region6: #{value_function_forward.1} parent=1 // loop_footer
      %s23 = sadd.s32 1, %s19
    $region7: #{value_function_forward.1} parent=1 // loop_footer_branch
      %18 = sbr.rel target = $region3
    $region8: #{value_function_forward.1} parent=1 // loop_exit
      _
    %1391 = vsyncpa [#allocation4], 1
    %s1392 = scalar_lea.sflag [#allocation4], 1
    %1393 = vsyncpa %s1392, 1

</llo_original>
